<compile_context>
chip_gen: v6e
topology: v6e:2x2x1
jax: 0.10.0
libtpu: 0.0.40
codegen_flags: <defaults>
</compile_context>

<pallas_src>
import functools

import jax
import jax.numpy as jnp
from jax import lax
from jax.experimental import pallas as pl
from jax.experimental.pallas import tpu as pltpu


def _pick_tile(dim, target):
    """Largest tile <= target that divides dim and respects (8, 128) tiling."""
    if dim <= target:
        return dim
    for t in range(target, 7, -1):
        if dim % t == 0 and t % 8 == 0:
            return t
    return dim  # fall back to a full (untiled) block


# --------------------------- linear projection ------------------------------

def _linear_kernel(x_ref, w_ref, b_ref, o_ref, *, mxu_dtype):
    x = x_ref[...].astype(mxu_dtype)
    w = w_ref[...].astype(mxu_dtype)
    acc = jnp.dot(x, w, preferred_element_type=jnp.float32)
    acc = acc + b_ref[...].astype(jnp.float32)
    o_ref[...] = acc.astype(o_ref.dtype)


def _linear(x2d, w_t, b, *, out_dtype, mxu_dtype, row_block=256):
    """x2d: (R, E_in), w_t: (E_in, E_out) (pre-transposed), b: (E_out,)."""
    R, E_in = x2d.shape
    E_out = w_t.shape[1]
    tr = _pick_tile(R, row_block)

    kernel = functools.partial(_linear_kernel, mxu_dtype=mxu_dtype)
    return pl.pallas_call(
        kernel,
        out_shape=jax.ShapeDtypeStruct((R, E_out), out_dtype),
        grid_spec=pltpu.PrefetchScalarGridSpec(
            num_scalar_prefetch=0,
            grid=(R // tr,),
            in_specs=[
                pl.BlockSpec((tr, E_in), lambda r: (r, 0)),
                # grid-invariant weight / bias: single-buffered
                pl.BlockSpec((E_in, E_out), lambda r: (0, 0),
                             pipeline_mode=pl.Buffered(1)),
                pl.BlockSpec((1, E_out), lambda r: (0, 0),
                             pipeline_mode=pl.Buffered(1)),
            ],
            out_specs=pl.BlockSpec((tr, E_out), lambda r: (r, 0)),
        ),
        compiler_params=pltpu.CompilerParams(
            dimension_semantics=("parallel",),
            vmem_limit_bytes=32 * 1024 * 1024),
    )(x2d, w_t, b.reshape(1, E_out))


# --------------------------- flash attention ---------------------------------

def _flash_attn_kernel(q_ref, k_ref, v_ref, o_ref, m_ref, l_ref, acc_ref,
                       *, approx_recip):
    j = pl.program_id(2)

    @pl.when(j == 0)
    def _():
        m_ref[...] = jnp.full(m_ref.shape, -jnp.inf, dtype=jnp.float32)
        l_ref[...] = jnp.zeros(l_ref.shape, dtype=jnp.float32)
        acc_ref[...] = jnp.zeros(acc_ref.shape, dtype=jnp.float32)

    q = q_ref[...]                      # (tq,  E) -- already scaled by 1/sqrt(E)
    k = k_ref[...]                      # (tkv, E)
    v = v_ref[...]                      # (tkv, E)

    # Scores: contract last dims directly (no k.T materialization).
    s = lax.dot_general(q, k, dimension_numbers=(((1,), (1,)), ((), ())),
                        preferred_element_type=jnp.float32)      # (tq, tkv)

    m_prev = m_ref[...]
    m_new = jnp.maximum(m_prev, jnp.max(s, axis=-1, keepdims=True))
    alpha = jnp.exp(m_prev - m_new)
    p = jnp.exp(s - m_new)

    l_ref[...] = alpha * l_ref[...] + jnp.sum(p, axis=-1, keepdims=True)
    acc_ref[...] = alpha * acc_ref[...] + jnp.dot(
        p.astype(v.dtype), v, preferred_element_type=jnp.float32)
    m_ref[...] = m_new

    @pl.when(j == pl.num_programs(2) - 1)
    def _():
        inv = pl.reciprocal(l_ref[...], approx=approx_recip)
        o_ref[...] = (acc_ref[...] * inv).astype(o_ref.dtype)


def _flash_attention(q, k, v, *, out_dtype, approx_recip,
                     q_block=128, kv_block=256):
    B, Sx, E = q.shape
    _, Sy, _ = k.shape
    tq = _pick_tile(Sx, q_block)
    tkv = _pick_tile(Sy, kv_block)

    kernel = functools.partial(_flash_attn_kernel, approx_recip=approx_recip)
    return pl.pallas_call(
        kernel,
        out_shape=jax.ShapeDtypeStruct((B, Sx, E), out_dtype),
        grid_spec=pltpu.PrefetchScalarGridSpec(
            num_scalar_prefetch=0,
            grid=(B, Sx // tq, Sy // tkv),
            in_specs=[
                pl.BlockSpec((None, tq, E), lambda b, i, j: (b, i, 0)),
                pl.BlockSpec((None, tkv, E), lambda b, i, j: (b, j, 0)),
                pl.BlockSpec((None, tkv, E), lambda b, i, j: (b, j, 0)),
            ],
            out_specs=pl.BlockSpec((None, tq, E), lambda b, i, j: (b, i, 0)),
            scratch_shapes=[
                pltpu.VMEM((tq, 1), jnp.float32),   # running max  m
                pltpu.VMEM((tq, 1), jnp.float32),   # running sum  l
                pltpu.VMEM((tq, E), jnp.float32),   # output accumulator
            ],
        ),
        compiler_params=pltpu.CompilerParams(
            dimension_semantics=("parallel", "parallel", "arbitrary"),
            vmem_limit_bytes=32 * 1024 * 1024),
    )(q, k, v)


# ------------------------------ public wrapper --------------------------------

def simple_self_attention(x, y, wq, bq, wk, bk, wv, bv, *,
                          compute_dtype=jnp.bfloat16,
                          q_block=128, kv_block=256):
    """x: (B, Sx, E), y: (B, Sy, E); w*: (E_out, E_in) PyTorch nn.Linear layout."""
    B, Sx, E = x.shape
    _, Sy, _ = y.shape
    scale = 1.0 / (float(E) ** 0.5)

    # nn.Linear does x @ W.T + b -> pre-transpose to (in, out).
    # Fold the 1/sqrt(E) attention scale into the Q projection on the host.
    wq_t = wq.T * scale
    bq_s = bq * scale
    wk_t, wv_t = wk.T, wv.T

    # Collapse batch into the row/sublane dimension for the projections and
    # compute K/V exactly once (no recompute per query tile).
    x2d = x.reshape(B * Sx, E)
    y2d = y.reshape(B * Sy, E)
    q = _linear(x2d, wq_t, bq_s, out_dtype=compute_dtype,
                mxu_dtype=compute_dtype).reshape(B, Sx, E)
    k = _linear(y2d, wk_t, bk, out_dtype=compute_dtype,
                mxu_dtype=compute_dtype).reshape(B, Sy, E)
    v = _linear(y2d, wv_t, bv, out_dtype=compute_dtype,
                mxu_dtype=compute_dtype).reshape(B, Sy, E)

    approx = compute_dtype != jnp.float32
    return _flash_attention(q, k, v, out_dtype=x.dtype, approx_recip=approx,
                            q_block=q_block, kv_block=kv_block)


# ------------------------------ reference / test -------------------------------

def _reference(x, y, wq, bq, wk, bk, wv, bv):
    E = x.shape[-1]
    hp = jax.lax.Precision.HIGHEST
    q = jnp.einsum("bse,oe->bso", x, wq, precision=hp) + bq
    k = jnp.einsum("bse,oe->bso", y, wk, precision=hp) + bk
    v = jnp.einsum("bse,oe->bso", y, wv, precision=hp) + bv
    scores = jnp.einsum("bqe,bke->bqk", q, k, precision=hp) / (float(E) ** 0.5)
    attn = jax.nn.softmax(scores, axis=-1)
    return jnp.einsum("bqk,bke->bqe", attn, v, precision=hp)


if __name__ == "__main__":
    # Small analogue of the embed_size=1024 module; Sx != Sy and small tile
    # sizes so multiple query/kv blocks exercise the online-softmax path.
    B, Sx, Sy, E = 2, 16, 24, 128

    key = jax.random.PRNGKey(0)
    kx, ky, k1, k2, k3, k4, k5, k6 = jax.random.split(key, 8)

    x = jax.random.normal(kx, (B, Sx, E), dtype=jnp.float32)
    y = jax.random.normal(ky, (B, Sy, E), dtype=jnp.float32)

    # nn.Linear default init: U(-1/sqrt(in), 1/sqrt(in)) for weights and biases
    bound = 1.0 / (E ** 0.5)
    wq = jax.random.uniform(k1, (E, E), jnp.float32, -bound, bound)
    bq = jax.random.uniform(k2, (E,), jnp.float32, -bound, bound)
    wk = jax.random.uniform(k3, (E, E), jnp.float32, -bound, bound)
    bk = jax.random.uniform(k4, (E,), jnp.float32, -bound, bound)
    wv = jax.random.uniform(k5, (E, E), jnp.float32, -bound, bound)
    bv = jax.random.uniform(k6, (E,), jnp.float32, -bound, bound)

    ref = _reference(x, y, wq, bq, wk, bk, wv, bv)

    # Exactness check: f32 MXU path, exact reciprocal.
    out_f32 = simple_self_attention(x, y, wq, bq, wk, bk, wv, bv,
                                    compute_dtype=jnp.float32,
                                    q_block=8, kv_block=8)
    out_f32 = jax.block_until_ready(out_f32)
    assert out_f32.shape == (B, Sx, E)
    assert jnp.allclose(out_f32, ref, atol=1e-4, rtol=1e-4), "f32 mismatch"

    # Performance path: bf16 MXU operands, f32 accumulation, approx reciprocal.
    out_bf16 = simple_self_attention(x, y, wq, bq, wk, bk, wv, bv,
                                     compute_dtype=jnp.bfloat16,
                                     q_block=8, kv_block=8)
    out_bf16 = jax.block_until_ready(out_bf16)
    assert out_bf16.shape == (B, Sx, E)
    assert jnp.allclose(out_bf16, ref, atol=4e-2, rtol=4e-2), "bf16 mismatch"

    print("KERNEL_OK")
</pallas_src>

<mosaic_0001>
module attributes {stable_mosaic.version = 11 : i64} {
  func.func @_linear_kernel(%arg0: i32, %arg1: memref<32x128xf32, #tpu.memory_space<vmem>>, %arg2: memref<128x128xf32, #tpu.memory_space<vmem>>, %arg3: memref<1x128xf32, #tpu.memory_space<vmem>>, %arg4: memref<32x128xf32, #tpu.memory_space<vmem>>) attributes {dimension_semantics = [#tpu.dimension_semantics<parallel>], iteration_bounds = array<i64: 1>, scalar_prefetch = 0 : i64, scratch_operands = 0 : i64, tpu.core_type = #tpu.core_type<tc>, window_params = [{transform_indices = @transform_0, window_bounds = array<i64: 32, 128>}, {pipeline_mode = #tpu.pipeline_mode<synchronous>, transform_indices = @transform_1, window_bounds = array<i64: 128, 128>}, {pipeline_mode = #tpu.pipeline_mode<synchronous>, transform_indices = @transform_2, window_bounds = array<i64: 1, 128>}, {transform_indices = @transform_3, window_bounds = array<i64: 32, 128>}]} {
    %c0 = arith.constant 0 : index
    %c0_0 = arith.constant 0 : index
    %0 = vector.load %arg1[%c0, %c0_0] : memref<32x128xf32, #tpu.memory_space<vmem>>, vector<32x128xf32>
    %c0_1 = arith.constant 0 : index
    %c0_2 = arith.constant 0 : index
    %1 = vector.load %arg2[%c0_1, %c0_2] : memref<128x128xf32, #tpu.memory_space<vmem>>, vector<128x128xf32>
    %cst = arith.constant dense<0.000000e+00> : vector<32x128xf32>
    %2 = tpu.matmul %0, %1, %cst {dimension_numbers = #tpu.dot_dimension_numbers<[1], [0], [0], [1], [0, 0, 1, 1], [], []>} : vector<32x128xf32>, vector<128x128xf32>, vector<32x128xf32> -> vector<32x128xf32>
    %c0_3 = arith.constant 0 : index
    %c0_4 = arith.constant 0 : index
    %3 = vector.load %arg3[%c0_3, %c0_4] : memref<1x128xf32, #tpu.memory_space<vmem>>, vector<1x128xf32>
    %4 = vector.broadcast %3 : vector<1x128xf32> to vector<32x128xf32>
    %5 = arith.addf %2, %4 : vector<32x128xf32>
    %c0_5 = arith.constant 0 : index
    %c0_6 = arith.constant 0 : index
    %6 = vector.load %arg4[%c0_5, %c0_6] : memref<32x128xf32, #tpu.memory_space<vmem>>, vector<32x128xf32>
    tpu.vector_store %arg4[%c0_5, %c0_6], %5 {strides = array<i32>} : memref<32x128xf32, #tpu.memory_space<vmem>>, vector<32x128xf32>,
    return
  }
  func.func @transform_0(%arg0: i32) -> (i32, i32) {
    %c0_i32 = arith.constant 0 : i32
    %c0_i32_0 = arith.constant 0 : i32
    return %arg0, %c0_i32 : i32, i32
  }
  func.func @transform_1(%arg0: i32) -> (i32, i32) {
    %c0_i32 = arith.constant 0 : i32
    %c0_i32_0 = arith.constant 0 : i32
    %c0_i32_1 = arith.constant 0 : i32
    return %c0_i32, %c0_i32_0 : i32, i32
  }
  func.func @transform_2(%arg0: i32) -> (i32, i32) {
    %c0_i32 = arith.constant 0 : i32
    %c0_i32_0 = arith.constant 0 : i32
    %c0_i32_1 = arith.constant 0 : i32
    return %c0_i32, %c0_i32_0 : i32, i32
  }
  func.func @transform_3(%arg0: i32) -> (i32, i32) {
    %c0_i32 = arith.constant 0 : i32
    %c0_i32_0 = arith.constant 0 : i32
    return %arg0, %c0_i32 : i32, i32
  }
}

</mosaic_0001>

<llo_original>
// kernel: tpu_custom_call.1
$region0: #{tpu_custom_call.1}
  #allocation0 [shape = 'u32[]', space=smem, size = 0x4, offset = 0x4, fixed_abs, tag = 'smem constant byte address 0x4 - core index']
  #allocation1 [shape = 'u32[144,128]{1,0:T(1,128)}', space=vmem, size = 0x12000, scoped, tag = 'internal scratch']
  %s0 = inlined_call_operand.hbm [shape: f32[32,128], index: 0, kind: input, shape index: {}]
  %s1 = inlined_call_operand.hbm [shape: f32[128,128], index: 1, kind: input, shape index: {}]
  %s2 = inlined_call_operand.vmem [shape: f32[1,128], index: 2, kind: input, shape index: {}]
  %s3 = inlined_call_operand.hbm [shape: f32[32,128], index: 3, kind: output, shape index: {}]
  %s4 = sld [smem:[#allocation0]]
  $region30: #{tpu_custom_call.1} parent=0
    _
  %s6 = ssub.s32 1, %s4
  %s7 = scalar_select 0, %s6, %s4
  $region1: #{tpu_custom_call.1} parent=0
    #allocation2 [shape = 'u8[16384]{0}', space=vmem, size = 0x4000, scoped, tag = 'input window, operand 0, single buffered']
    #allocation3 [shape = 's32[1]{0}', space=sflag, size = 0x4, scoped, tag = 'scoped memory for tpu_custom_call.1']
    #allocation4 [shape = 's32[1]{0}', space=sflag, size = 0x4, scoped, tag = 'scoped memory for tpu_custom_call.1']
    #allocation5 [shape = 'u8[65536]{0}', space=vmem, size = 0x10000, scoped, tag = 'input window, operand 1, single buffered']
    #allocation6 [shape = 's32[1]{0}', space=sflag, size = 0x4, scoped, tag = 'scoped memory for tpu_custom_call.1']
    #allocation7 [shape = 'u8[16384]{0}', space=vmem, size = 0x4000, scoped, tag = 'output window, operand 0, single buffered']
    %8 = vsyncpa [#allocation3], 0
    %9 = vsyncpa [#allocation6], 0
    %10 = vsyncpa [#allocation4], 0
    // Predicated region
    $region2: #{tpu_custom_call.1} parent=1 // pred_check
      _
    $region3: #{tpu_custom_call.1} parent=1 // pred_check_branch
      %12 = sbr.rel (0) target = $region5
    $region4: #{tpu_custom_call.1} parent=1 // pred_region
      %s14 = ssub.s32 512, 512
      %15 = vsyncadd [#allocation3], %s14
      %s16 = sshll.u32 [#allocation2], 4
      %s17 = int_to_ptr.vmem [resolvable:$true] %s16
      %22 = dma.hbm_to_vmem [thread:$0]  %s0, 512, %s17, [#allocation3], 128, 128, 8
    $region5: #{tpu_custom_call.1} parent=1 // pred_fallthru
      _
    // Predicated region
    $region6: #{tpu_custom_call.1} parent=1 // pred_check
      _
    $region7: #{tpu_custom_call.1} parent=1 // pred_check_branch
      %24 = sbr.rel (0) target = $region9
    $region8: #{tpu_custom_call.1} parent=1 // pred_region
      %s26 = ssub.s32 2048, 2048
      %27 = vsyncadd [#allocation6], %s26
      %s28 = sshll.u32 [#allocation5], 4
      %s29 = int_to_ptr.vmem [resolvable:$true] %s28
      %34 = dma.hbm_to_vmem [thread:$0]  %s1, 2048, %s29, [#allocation6], 128, 128, 8
    $region9: #{tpu_custom_call.1} parent=1 // pred_fallthru
      _
    // Predicated region
    $region10: #{tpu_custom_call.1} parent=1 // pred_check
      _
    $region11: #{tpu_custom_call.1} parent=1 // pred_check_branch
      %36 = sbr.rel (0) target = $region13
    $region12: #{tpu_custom_call.1} parent=1 // pred_region
      _
    $region13: #{tpu_custom_call.1} parent=1 // pred_fallthru
      _
    // Predicated region
    $region14: #{tpu_custom_call.1} parent=1 // pred_check
      _
    $region15: #{tpu_custom_call.1} parent=1 // pred_check_branch
      %38 = sbr.rel (0) target = $region17
    $region16: #{tpu_custom_call.1} parent=1 // pred_region
      %39 = dma.done [#allocation3], 512
    $region17: #{tpu_custom_call.1} parent=1 // pred_fallthru
      _
    // Predicated region
    $region18: #{tpu_custom_call.1} parent=1 // pred_check
      _
    $region19: #{tpu_custom_call.1} parent=1 // pred_check_branch
      %41 = sbr.rel (0) target = $region21
    $region20: #{tpu_custom_call.1} parent=1 // pred_region
      %42 = dma.done [#allocation6], 2048
    $region21: #{tpu_custom_call.1} parent=1 // pred_fallthru
      _
    %v43 = vld [vmem:[#allocation2] sm:$0xff]
    %v44 = vld [vmem:[#allocation2 + $0x8] sm:$0xff]
    %v45 = vld [vmem:[#allocation2 + $0x10] sm:$0xff]
    %v46 = vld [vmem:[#allocation2 + $0x18] sm:$0xff]
    %v47 = vld [vmem:[#allocation5] sm:$0xff]
    %v48 = vld [vmem:[#allocation5 + $0x8] sm:$0xff]
    %v49 = vld [vmem:[#allocation5 + $0x10] sm:$0xff]
    %v50 = vld [vmem:[#allocation5 + $0x18] sm:$0xff]
    %v51 = vld [vmem:[#allocation5 + $0x20] sm:$0xff]
    %v52 = vld [vmem:[#allocation5 + $0x28] sm:$0xff]
    %v53 = vld [vmem:[#allocation5 + $0x30] sm:$0xff]
    %v54 = vld [vmem:[#allocation5 + $0x38] sm:$0xff]
    %v55 = vld [vmem:[#allocation5 + $0x40] sm:$0xff]
    %v56 = vld [vmem:[#allocation5 + $0x48] sm:$0xff]
    %v57 = vld [vmem:[#allocation5 + $0x50] sm:$0xff]
    %v58 = vld [vmem:[#allocation5 + $0x58] sm:$0xff]
    %v59 = vld [vmem:[#allocation5 + $0x60] sm:$0xff]
    %v60 = vld [vmem:[#allocation5 + $0x68] sm:$0xff]
    %v61 = vld [vmem:[#allocation5 + $0x70] sm:$0xff]
    %v62 = vld [vmem:[#allocation5 + $0x78] sm:$0xff]
    %v63 = vld [vmem:[%s2] sm:$0x1]
    %v65 = vlaneseq
    %v66 = vshrl.u32 %v65, 7
    %v67 = vsub.s32 0, %v66
    %v68 = vrot.slane %v63, %v67
    %70 = vmatprep.subr.mxu0 0.0
    %71 = vmatpush1.msra.mxu0 %v62
    %72 = vmatprep.subr.mxu0 0.0
    %73 = vmatpush1.msra.mxu0 %v61
    %74 = vmatprep.subr.mxu0 0.0
    %75 = vmatpush1.msra.mxu0 %v60
    %76 = vmatprep.subr.mxu0 0.0
    %77 = vmatpush1.msra.mxu0 %v59
    %78 = vmatprep.subr.mxu0 0.0
    %79 = vmatpush1.msra.mxu0 %v58
    %80 = vmatprep.subr.mxu0 0.0
    %81 = vmatpush1.msra.mxu0 %v57
    %82 = vmatprep.subr.mxu0 0.0
    %83 = vmatpush1.msra.mxu0 %v56
    %84 = vmatprep.subr.mxu0 0.0
    %85 = vmatpush1.msra.mxu0 %v55
    %86 = vmatprep.subr.mxu0 0.0
    %87 = vmatpush1.msra.mxu0 %v54
    %88 = vmatprep.subr.mxu0 0.0
    %89 = vmatpush1.msra.mxu0 %v53
    %90 = vmatprep.subr.mxu0 0.0
    %91 = vmatpush1.msra.mxu0 %v52
    %92 = vmatprep.subr.mxu0 0.0
    %93 = vmatpush1.msra.mxu0 %v51
    %94 = vmatprep.subr.mxu0 0.0
    %95 = vmatpush1.msra.mxu0 %v50
    %96 = vmatprep.subr.mxu0 0.0
    %97 = vmatpush1.msra.mxu0 %v49
    %98 = vmatprep.subr.mxu0 0.0
    %99 = vmatpush1.msra.mxu0 %v48
    %100 = vmatprep.subr.mxu0 0.0
    %101 = vmatpush1.msra.mxu0 %v47
    %102 = vmatprep.subr.mxu0 0.0
    %103 = vmatpush2.msra.mxu0 0.0
    %104 = vmatprep.subr.mxu0 0.0
    %105 = vmatpush2.msra.mxu0 0.0
    %106 = vmatprep.subr.mxu0 0.0
    %107 = vmatpush2.msra.mxu0 0.0
    %108 = vmatprep.subr.mxu0 0.0
    %109 = vmatpush2.msra.mxu0 0.0
    %110 = vmatprep.subr.mxu0 0.0
    %111 = vmatpush2.msra.mxu0 0.0
    %112 = vmatprep.subr.mxu0 0.0
    %113 = vmatpush2.msra.mxu0 0.0
    %114 = vmatprep.subr.mxu0 0.0
    %115 = vmatpush2.msra.mxu0 0.0
    %116 = vmatprep.subr.mxu0 0.0
    %117 = vmatpush2.msra.mxu0 0.0
    %118 = vmatprep.subr.mxu0 0.0
    %119 = vmatpush2.msra.mxu0 0.0
    %120 = vmatprep.subr.mxu0 0.0
    %121 = vmatpush2.msra.mxu0 0.0
    %122 = vmatprep.subr.mxu0 0.0
    %123 = vmatpush2.msra.mxu0 0.0
    %124 = vmatprep.subr.mxu0 0.0
    %125 = vmatpush2.msra.mxu0 0.0
    %126 = vmatprep.subr.mxu0 0.0
    %127 = vmatpush2.msra.mxu0 0.0
    %128 = vmatprep.subr.mxu0 0.0
    %129 = vmatpush2.msra.mxu0 0.0
    %130 = vmatprep.subr.mxu0 0.0
    %131 = vmatpush2.msra.mxu0 0.0
    %132 = vmatprep.subr.mxu0 0.0
    %133 = vmatpush2.msra.mxu0 0.0
    %134 = vmatprep.mubr.f32.mxu0 0.0
    %135 = vmatmul.mubr.f32.gmra.mxu0 %v43
    %v136 = vpop.f32.mrf.mxu0
    %v137 = vadd.f32 %v68, %v136
    %v138 = vpop.f32.mrf.mxu0
    %139 = vmatprep.mubr.f32.mxu0 0.0
    %140 = vmatmul.mubr.f32.gmra.mxu0 %v44
    %v141 = vpop.f32.mrf.mxu0
    %v142 = vadd.f32 %v68, %v141
    %v143 = vpop.f32.mrf.mxu0
    %144 = vmatprep.mubr.f32.mxu0 0.0
    %145 = vmatmul.mubr.f32.gmra.mxu0 %v45
    %v146 = vpop.f32.mrf.mxu0
    %v147 = vadd.f32 %v68, %v146
    %v148 = vpop.f32.mrf.mxu0
    %149 = vmatprep.mubr.f32.mxu0 0.0
    %150 = vmatmul.mubr.f32.gmra.mxu0 %v46
    %v151 = vpop.f32.mrf.mxu0
    %v152 = vadd.f32 %v68, %v151
    %v153 = vpop.f32.mrf.mxu0
    %154 = vdwg.mxu0
    %155 = vst [vmem:[#allocation7] sm:$0xff] %v137
    %156 = vst [vmem:[#allocation7 + $0x8] sm:$0xff] %v142
    %157 = vst [vmem:[#allocation7 + $0x10] sm:$0xff] %v147
    %158 = vst [vmem:[#allocation7 + $0x18] sm:$0xff] %v152
    // Predicated region
    $region22: #{tpu_custom_call.1} parent=1 // pred_check
      _
    $region23: #{tpu_custom_call.1} parent=1 // pred_check_branch
      %160 = sbr.rel (0) target = $region25
    $region24: #{tpu_custom_call.1} parent=1 // pred_region
      %s162 = ssub.s32 512, 512
      %163 = vsyncadd [#allocation4], %s162
      %s164 = sshll.u32 [#allocation7], 4
      %s165 = int_to_ptr.vmem [resolvable:$true] %s164
      %170 = dma.vmem_to_hbm [thread:$0]  %s165, 512, %s3, [#allocation4], 128, 128, 8
    $region25: #{tpu_custom_call.1} parent=1 // pred_fallthru
      _
    // Predicated region
    $region26: #{tpu_custom_call.1} parent=1 // pred_check
      _
    $region27: #{tpu_custom_call.1} parent=1 // pred_check_branch
      %172 = sbr.rel (0) target = $region29
    $region28: #{tpu_custom_call.1} parent=1 // pred_region
      %173 = dma.done [#allocation4], 512
    $region29: #{tpu_custom_call.1} parent=1 // pred_fallthru
      _
    %174 = vsyncpa [#allocation3], 1
    %175 = vsyncpa [#allocation6], 1
    %176 = vsyncpa [#allocation4], 1

</llo_original>
